<compile_context>
chip_gen: v5e
topology: v5e:2x2
jax: 0.10.0
libtpu: 0.0.40
codegen_flags: <defaults>
</compile_context>

<pallas_src>
import jax
import jax.numpy as jnp
from jax.experimental import pallas as pl
from jax.experimental.pallas import tpu as pltpu


# ---- logical module config (matches the PyTorch spec) ----
NUMBER_OF_INPUTS = 32
HIDDEN_LAYER = 64
NUMBER_OF_OUTPUTS = 8

# Max rows per grid step.  VMEM per step at 2048 rows (x tile, h1/h2 temporaries, out
# tile, tiny weights, double-buffered activations) is ~1.5 MiB — far under the 32 MiB
# default scoped limit on every generation, including v7x's halved VMEM.
MAX_TILE_B = 2048


def mlp_kernel(x_ref, w1_ref, b1_ref, w2_ref, b2_ref, w3_ref, b3_ref, o_ref):
    # Hot path: three MXU matmuls (bf16 operands, f32 accumulation) + EUP tanh,
    # everything VMEM-resident.  Weights arrive pre-cast to bf16.
    x = x_ref[...].astype(jnp.bfloat16)
    h1 = jnp.tanh(
        jnp.dot(x, w1_ref[...], preferred_element_type=jnp.float32) + b1_ref[...]
    )
    h2 = jnp.tanh(
        jnp.dot(h1.astype(jnp.bfloat16), w2_ref[...],
                preferred_element_type=jnp.float32) + b2_ref[...]
    )
    out = (
        jnp.dot(h2.astype(jnp.bfloat16), w3_ref[...],
                preferred_element_type=jnp.float32) + b3_ref[...]
    )
    o_ref[...] = out.astype(o_ref.dtype)


def _round_up(n, m):
    return ((n + m - 1) // m) * m


def _choose_tile_b(B):
    """Static (trace-time) batch-tile choice."""
    if B <= 512:
        # Single step; block batch dim == full array dim (always layout-legal).
        return B
    # >= 2 grid steps for moderate batches (feeds both TensorCores on v7x),
    # capped at MAX_TILE_B; multiple of 256 keeps blocks sublane-aligned.
    return min(MAX_TILE_B, _round_up(pl.cdiv(B, 2), 256))


@jax.jit
def neural_network_forward(x, params):
    """x: (B, number_of_inputs) f32; params from prepare_params().
    Returns (B, number_of_outputs) f32."""
    w1, b1, w2, b2, w3, b3 = params
    B = x.shape[0]
    tile_b = _choose_tile_b(B)
    grid = (pl.cdiv(B, tile_b),)

    # Activations stream per grid step (narrow, unpadded); weights/biases use constant
    # index_maps so the pipeline emitter keeps them resident in VMEM across steps.
    act_in_spec = pl.BlockSpec((tile_b, NUMBER_OF_INPUTS), lambda i: (i, 0),
                               memory_space=pltpu.VMEM)
    const_spec = lambda a: pl.BlockSpec(a.shape, lambda i: (0, 0),
                                        memory_space=pltpu.VMEM)
    out_spec = pl.BlockSpec((tile_b, NUMBER_OF_OUTPUTS), lambda i: (i, 0),
                            memory_space=pltpu.VMEM)

    flops = 2 * B * (NUMBER_OF_INPUTS * HIDDEN_LAYER
                     + HIDDEN_LAYER * HIDDEN_LAYER
                     + HIDDEN_LAYER * NUMBER_OF_OUTPUTS)
    bytes_accessed = (
        4 * B * (NUMBER_OF_INPUTS + NUMBER_OF_OUTPUTS)                 # f32 x in, f32 out
        + 2 * (NUMBER_OF_INPUTS * HIDDEN_LAYER                         # bf16 weights
               + HIDDEN_LAYER * HIDDEN_LAYER
               + HIDDEN_LAYER * NUMBER_OF_OUTPUTS)
        + 4 * (2 * HIDDEN_LAYER + NUMBER_OF_OUTPUTS)                   # f32 biases
    )
    cost = pl.CostEstimate(flops=flops,
                           transcendentals=2 * B * HIDDEN_LAYER,
                           bytes_accessed=bytes_accessed)

    return pl.pallas_call(
        mlp_kernel,
        out_shape=jax.ShapeDtypeStruct((B, NUMBER_OF_OUTPUTS), jnp.float32),
        grid=grid,
        in_specs=[act_in_spec,
                  const_spec(w1), const_spec(b1),
                  const_spec(w2), const_spec(b2),
                  const_spec(w3), const_spec(b3)],
        out_specs=out_spec,
        compiler_params=pltpu.CompilerParams(
            dimension_semantics=("parallel",)),   # second TC on v7x; harmless on v5e/v6e
        cost_estimate=cost,
    )(x, w1, b1, w2, b2, w3, b3)


def init_params(key):
    """Deterministic init mimicking PyTorch nn.Linear defaults: U(-1/sqrt(fan_in), +1/sqrt(fan_in))."""
    def linear(key, fan_in, fan_out):
        kw, kb = jax.random.split(key)
        bound = 1.0 / (fan_in ** 0.5)
        # stored as (in, out) so kernel does x @ W
        w = jax.random.uniform(kw, (fan_in, fan_out), jnp.float32, -bound, bound)
        b = jax.random.uniform(kb, (1, fan_out), jnp.float32, -bound, bound)
        return w, b

    k1, k2, k3 = jax.random.split(key, 3)
    w1, b1 = linear(k1, NUMBER_OF_INPUTS, HIDDEN_LAYER)
    w2, b2 = linear(k2, HIDDEN_LAYER, HIDDEN_LAYER)
    w3, b3 = linear(k3, HIDDEN_LAYER, NUMBER_OF_OUTPUTS)
    return (w1, b1, w2, b2, w3, b3)


def prepare_params(params):
    """One-time preprocessing OUTSIDE the per-call path: cast weights to bf16
    (MXU-native on v6e/v7x), keep biases f32 for the post-accumulation add."""
    w1, b1, w2, b2, w3, b3 = params
    bf = jnp.bfloat16
    return (w1.astype(bf), b1, w2.astype(bf), b2, w3.astype(bf), b3)


def reference_forward_f32(x, params):
    """Pure-f32 reference matching the PyTorch module's math."""
    w1, b1, w2, b2, w3, b3 = params
    h1 = jnp.tanh(x @ w1 + b1)
    h2 = jnp.tanh(h1 @ w2 + b2)
    return h2 @ w3 + b3


def reference_forward_bf16(x, prepared):
    """Reference using the same bf16-operand / f32-accumulation scheme as the kernel."""
    w1, b1, w2, b2, w3, b3 = prepared
    bf = jnp.bfloat16
    h1 = jnp.tanh(jnp.dot(x.astype(bf), w1, preferred_element_type=jnp.float32) + b1)
    h2 = jnp.tanh(jnp.dot(h1.astype(bf), w2, preferred_element_type=jnp.float32) + b2)
    return jnp.dot(h2.astype(bf), w3, preferred_element_type=jnp.float32) + b3


if __name__ == "__main__":
    key = jax.random.PRNGKey(0)
    kx, kp = jax.random.split(key)
    params = init_params(kp)
    kernel_params = prepare_params(params)

    # Small batch (single grid step) and a larger non-multiple-of-tile batch
    # (exercises the multi-step grid, weight residency, and edge-block masking).
    for batch in (8, 1000):
        x = jax.random.normal(jax.random.fold_in(kx, batch),
                              (batch, NUMBER_OF_INPUTS), jnp.float32)
        out = jax.block_until_ready(neural_network_forward(x, kernel_params))
        assert out.shape == (batch, NUMBER_OF_OUTPUTS)

        # Tight check against a reference using the identical bf16/f32-accum scheme.
        ref_bf16 = reference_forward_bf16(x, kernel_params)
        assert jnp.allclose(out, ref_bf16, atol=1e-4, rtol=1e-4), \
            f"kernel vs bf16 reference mismatch at batch={batch}"

        # Loose check against the pure-f32 PyTorch-equivalent math (bf16 weight
        # rounding accounts for the gap).
        ref_f32 = reference_forward_f32(x, params)
        assert jnp.allclose(out, ref_f32, atol=1e-1, rtol=1e-1), \
            f"kernel vs f32 reference mismatch at batch={batch}"

    print("KERNEL_OK")
</pallas_src>

<mosaic_0001>
module attributes {stable_mosaic.version = 11 : i64} {
  func.func @mlp_kernel(%arg0: i32, %arg1: memref<8x32xf32, #tpu.memory_space<vmem>>, %arg2: memref<32x64xbf16, #tpu.memory_space<vmem>>, %arg3: memref<1x64xf32, #tpu.memory_space<vmem>>, %arg4: memref<64x64xbf16, #tpu.memory_space<vmem>>, %arg5: memref<1x64xf32, #tpu.memory_space<vmem>>, %arg6: memref<64x8xbf16, #tpu.memory_space<vmem>>, %arg7: memref<1x8xf32, #tpu.memory_space<vmem>>, %arg8: memref<8x8xf32, #tpu.memory_space<vmem>>) attributes {dimension_semantics = [#tpu.dimension_semantics<parallel>], iteration_bounds = array<i64: 1>, scalar_prefetch = 0 : i64, scratch_operands = 0 : i64, tpu.core_type = #tpu.core_type<tc>, window_params = [{transform_indices = @transform_0, window_bounds = array<i64: 8, 32>}, {pipeline_mode = #tpu.pipeline_mode<synchronous>, transform_indices = @transform_1, window_bounds = array<i64: 32, 64>}, {pipeline_mode = #tpu.pipeline_mode<synchronous>, transform_indices = @transform_2, window_bounds = array<i64: 1, 64>}, {pipeline_mode = #tpu.pipeline_mode<synchronous>, transform_indices = @transform_3, window_bounds = array<i64: 64, 64>}, {pipeline_mode = #tpu.pipeline_mode<synchronous>, transform_indices = @transform_4, window_bounds = array<i64: 1, 64>}, {pipeline_mode = #tpu.pipeline_mode<synchronous>, transform_indices = @transform_5, window_bounds = array<i64: 64, 8>}, {pipeline_mode = #tpu.pipeline_mode<synchronous>, transform_indices = @transform_6, window_bounds = array<i64: 1, 8>}, {transform_indices = @transform_7, window_bounds = array<i64: 8, 8>}]} {
    %c0 = arith.constant 0 : index
    %c0_0 = arith.constant 0 : index
    %0 = vector.load %arg1[%c0, %c0_0] : memref<8x32xf32, #tpu.memory_space<vmem>>, vector<8x32xf32>
    %1 = arith.truncf %0 : vector<8x32xf32> to vector<8x32xbf16>
    %c0_1 = arith.constant 0 : index
    %c0_2 = arith.constant 0 : index
    %2 = vector.load %arg2[%c0_1, %c0_2] : memref<32x64xbf16, #tpu.memory_space<vmem>>, vector<32x64xbf16>
    %cst = arith.constant dense<0.000000e+00> : vector<8x64xf32>
    %3 = tpu.matmul %1, %2, %cst {dimension_numbers = #tpu.dot_dimension_numbers<[1], [0], [0], [1], [0, 0, 1, 1], [], []>} : vector<8x32xbf16>, vector<32x64xbf16>, vector<8x64xf32> -> vector<8x64xf32>
    %c0_3 = arith.constant 0 : index
    %c0_4 = arith.constant 0 : index
    %4 = vector.load %arg3[%c0_3, %c0_4] : memref<1x64xf32, #tpu.memory_space<vmem>>, vector<1x64xf32>
    %5 = vector.broadcast %4 : vector<1x64xf32> to vector<8x64xf32>
    %6 = arith.addf %3, %5 : vector<8x64xf32>
    %7 = math.tanh %6 : vector<8x64xf32>
    %8 = arith.truncf %7 : vector<8x64xf32> to vector<8x64xbf16>
    %c0_5 = arith.constant 0 : index
    %c0_6 = arith.constant 0 : index
    %9 = vector.load %arg4[%c0_5, %c0_6] : memref<64x64xbf16, #tpu.memory_space<vmem>>, vector<64x64xbf16>
    %cst_7 = arith.constant dense<0.000000e+00> : vector<8x64xf32>
    %10 = tpu.matmul %8, %9, %cst_7 {dimension_numbers = #tpu.dot_dimension_numbers<[1], [0], [0], [1], [0, 0, 1, 1], [], []>} : vector<8x64xbf16>, vector<64x64xbf16>, vector<8x64xf32> -> vector<8x64xf32>
    %c0_8 = arith.constant 0 : index
    %c0_9 = arith.constant 0 : index
    %11 = vector.load %arg5[%c0_8, %c0_9] : memref<1x64xf32, #tpu.memory_space<vmem>>, vector<1x64xf32>
    %12 = vector.broadcast %11 : vector<1x64xf32> to vector<8x64xf32>
    %13 = arith.addf %10, %12 : vector<8x64xf32>
    %14 = math.tanh %13 : vector<8x64xf32>
    %15 = arith.truncf %14 : vector<8x64xf32> to vector<8x64xbf16>
    %c0_10 = arith.constant 0 : index
    %c0_11 = arith.constant 0 : index
    %16 = vector.load %arg6[%c0_10, %c0_11] : memref<64x8xbf16, #tpu.memory_space<vmem>>, vector<64x8xbf16>
    %cst_12 = arith.constant dense<0.000000e+00> : vector<8x8xf32>
    %17 = tpu.matmul %15, %16, %cst_12 {dimension_numbers = #tpu.dot_dimension_numbers<[1], [0], [0], [1], [0, 0, 1, 1], [], []>} : vector<8x64xbf16>, vector<64x8xbf16>, vector<8x8xf32> -> vector<8x8xf32>
    %c0_13 = arith.constant 0 : index
    %c0_14 = arith.constant 0 : index
    %18 = vector.load %arg7[%c0_13, %c0_14] : memref<1x8xf32, #tpu.memory_space<vmem>>, vector<1x8xf32>
    %19 = vector.broadcast %18 : vector<1x8xf32> to vector<8x8xf32>
    %20 = arith.addf %17, %19 : vector<8x8xf32>
    %c0_15 = arith.constant 0 : index
    %c0_16 = arith.constant 0 : index
    %21 = vector.load %arg8[%c0_15, %c0_16] : memref<8x8xf32, #tpu.memory_space<vmem>>, vector<8x8xf32>
    tpu.vector_store %arg8[%c0_15, %c0_16], %20 {strides = array<i32>} : memref<8x8xf32, #tpu.memory_space<vmem>>, vector<8x8xf32>,
    return
  }
  func.func @transform_0(%arg0: i32) -> (i32, i32) {
    %c0_i32 = arith.constant 0 : i32
    %c0_i32_0 = arith.constant 0 : i32
    return %arg0, %c0_i32 : i32, i32
  }
  func.func @transform_1(%arg0: i32) -> (i32, i32) {
    %c0_i32 = arith.constant 0 : i32
    %c0_i32_0 = arith.constant 0 : i32
    %c0_i32_1 = arith.constant 0 : i32
    return %c0_i32, %c0_i32_0 : i32, i32
  }
  func.func @transform_2(%arg0: i32) -> (i32, i32) {
    %c0_i32 = arith.constant 0 : i32
    %c0_i32_0 = arith.constant 0 : i32
    %c0_i32_1 = arith.constant 0 : i32
    return %c0_i32, %c0_i32_0 : i32, i32
  }
  func.func @transform_3(%arg0: i32) -> (i32, i32) {
    %c0_i32 = arith.constant 0 : i32
    %c0_i32_0 = arith.constant 0 : i32
    %c0_i32_1 = arith.constant 0 : i32
    return %c0_i32, %c0_i32_0 : i32, i32
  }
  func.func @transform_4(%arg0: i32) -> (i32, i32) {
    %c0_i32 = arith.constant 0 : i32
    %c0_i32_0 = arith.constant 0 : i32
    %c0_i32_1 = arith.constant 0 : i32
    return %c0_i32, %c0_i32_0 : i32, i32
  }
  func.func @transform_5(%arg0: i32) -> (i32, i32) {
    %c0_i32 = arith.constant 0 : i32
    %c0_i32_0 = arith.constant 0 : i32
    %c0_i32_1 = arith.constant 0 : i32
    return %c0_i32, %c0_i32_0 : i32, i32
  }
  func.func @transform_6(%arg0: i32) -> (i32, i32) {
    %c0_i32 = arith.constant 0 : i32
    %c0_i32_0 = arith.constant 0 : i32
    %c0_i32_1 = arith.constant 0 : i32
    return %c0_i32, %c0_i32_0 : i32, i32
  }
  func.func @transform_7(%arg0: i32) -> (i32, i32) {
    %c0_i32 = arith.constant 0 : i32
    %c0_i32_0 = arith.constant 0 : i32
    return %arg0, %c0_i32 : i32, i32
  }
}

</mosaic_0001>

<llo_original>
// kernel: neural_network_forward.1
$region0: #{neural_network_forward.1}
  #allocation0 [shape = 'u32[]', space=smem, size = 0x4, offset = 0x4, fixed_abs, tag = 'smem constant byte address 0x4 - core index']
  #allocation1 [shape = 'u32[72,128]{1,0:T(1,128)}', space=vmem, size = 0x9000, scoped, tag = 'internal scratch']
  %s0 = inlined_call_operand.hbm [shape: f32[8,32], index: 0, kind: input, shape index: {}]
  %s1 = inlined_call_operand.hbm [shape: bf16[32,64], index: 1, kind: input, shape index: {}]
  %s2 = inlined_call_operand.vmem [shape: f32[1,64], index: 2, kind: input, shape index: {}]
  %s3 = inlined_call_operand.vmem [shape: bf16[64,64], index: 3, kind: input, shape index: {}]
  %s4 = inlined_call_operand.vmem [shape: f32[1,64], index: 4, kind: input, shape index: {}]
  %s5 = inlined_call_operand.vmem [shape: bf16[64,8], index: 5, kind: input, shape index: {}]
  %s6 = inlined_call_operand.vmem [shape: f32[1,8], index: 6, kind: input, shape index: {}]
  %s7 = inlined_call_operand.hbm [shape: f32[8,8], index: 7, kind: output, shape index: {}]
  %s8 = sld [smem:[#allocation0]]
  $region46: #{neural_network_forward.1} parent=0
    _
  %s10 = ssub.s32 1, %s8
  %s11 = scalar_select 0, %s10, %s8
  $region1: #{neural_network_forward.1} parent=0
    #allocation2 [shape = 'u8[4096]{0}', space=vmem, size = 0x1000, scoped, tag = 'input window, operand 0, single buffered']
    #allocation3 [shape = 's32[1]{0}', space=sflag, size = 0x4, scoped, tag = 'scoped memory for neural_network_forward.1']
    #allocation4 [shape = 's32[1]{0}', space=sflag, size = 0x4, scoped, tag = 'scoped memory for neural_network_forward.1']
    #allocation5 [shape = 'u8[8192]{0}', space=vmem, size = 0x2000, scoped, tag = 'input window, operand 1, single buffered']
    #allocation6 [shape = 's32[1]{0}', space=sflag, size = 0x4, scoped, tag = 'scoped memory for neural_network_forward.1']
    #allocation7 [shape = 'u8[4096]{0}', space=vmem, size = 0x1000, scoped, tag = 'output window, operand 0, single buffered']
    %12 = vsyncpa [#allocation3], 0
    %13 = vsyncpa [#allocation6], 0
    %14 = vsyncpa [#allocation4], 0
    // Predicated region
    $region2: #{neural_network_forward.1} parent=1 // pred_check
      _
    $region3: #{neural_network_forward.1} parent=1 // pred_check_branch
      %16 = sbr.rel (0) target = $region5
    $region4: #{neural_network_forward.1} parent=1 // pred_region
      %18 = vsyncadd [#allocation3], 0
      %s20 = sshll.u32 %s0, 4
      %s21 = int_to_ptr.hbm [resolvable:$true] %s20
      %s22 = sshll.u32 [#allocation2], 4
      %s23 = int_to_ptr.vmem [resolvable:$true] %s22
      %25 = dma.hbm_to_vmem [thread:$0]  %s21, 128, %s23, [#allocation3]
    $region5: #{neural_network_forward.1} parent=1 // pred_fallthru
      _
    // Predicated region
    $region6: #{neural_network_forward.1} parent=1 // pred_check
      _
    $region7: #{neural_network_forward.1} parent=1 // pred_check_branch
      %27 = sbr.rel (0) target = $region9
    $region8: #{neural_network_forward.1} parent=1 // pred_region
      %29 = vsyncadd [#allocation6], 0
      %s30 = sshll.u32 %s1, 4
      %s31 = int_to_ptr.hbm [resolvable:$true] %s30
      %s32 = sshll.u32 [#allocation5], 4
      %s33 = int_to_ptr.vmem [resolvable:$true] %s32
      %38 = dma.hbm_to_vmem [thread:$0]  %s31, 256, %s33, [#allocation6], 64, 64, 4
    $region9: #{neural_network_forward.1} parent=1 // pred_fallthru
      _
    // Predicated region
    $region10: #{neural_network_forward.1} parent=1 // pred_check
      _
    $region11: #{neural_network_forward.1} parent=1 // pred_check_branch
      %40 = sbr.rel (0) target = $region13
    $region12: #{neural_network_forward.1} parent=1 // pred_region
      _
    $region13: #{neural_network_forward.1} parent=1 // pred_fallthru
      _
    // Predicated region
    $region14: #{neural_network_forward.1} parent=1 // pred_check
      _
    $region15: #{neural_network_forward.1} parent=1 // pred_check_branch
      %42 = sbr.rel (0) target = $region17
    $region16: #{neural_network_forward.1} parent=1 // pred_region
      _
    $region17: #{neural_network_forward.1} parent=1 // pred_fallthru
      _
    // Predicated region
    $region18: #{neural_network_forward.1} parent=1 // pred_check
      _
    $region19: #{neural_network_forward.1} parent=1 // pred_check_branch
      %44 = sbr.rel (0) target = $region21
    $region20: #{neural_network_forward.1} parent=1 // pred_region
      _
    $region21: #{neural_network_forward.1} parent=1 // pred_fallthru
      _
    // Predicated region
    $region22: #{neural_network_forward.1} parent=1 // pred_check
      _
    $region23: #{neural_network_forward.1} parent=1 // pred_check_branch
      %46 = sbr.rel (0) target = $region25
    $region24: #{neural_network_forward.1} parent=1 // pred_region
      _
    $region25: #{neural_network_forward.1} parent=1 // pred_fallthru
      _
    // Predicated region
    $region26: #{neural_network_forward.1} parent=1 // pred_check
      _
    $region27: #{neural_network_forward.1} parent=1 // pred_check_branch
      %48 = sbr.rel (0) target = $region29
    $region28: #{neural_network_forward.1} parent=1 // pred_region
      _
    $region29: #{neural_network_forward.1} parent=1 // pred_fallthru
      _
    // Predicated region
    $region30: #{neural_network_forward.1} parent=1 // pred_check
      _
    $region31: #{neural_network_forward.1} parent=1 // pred_check_branch
      %50 = sbr.rel (0) target = $region33
    $region32: #{neural_network_forward.1} parent=1 // pred_region
      %52 = dma.done [#allocation3], 128
    $region33: #{neural_network_forward.1} parent=1 // pred_fallthru
      _
    // Predicated region
    $region34: #{neural_network_forward.1} parent=1 // pred_check
      _
    $region35: #{neural_network_forward.1} parent=1 // pred_check_branch
      %54 = sbr.rel (0) target = $region37
    $region36: #{neural_network_forward.1} parent=1 // pred_region
      %56 = dma.done [#allocation6], 256
    $region37: #{neural_network_forward.1} parent=1 // pred_fallthru
      _
    %v58 = vld [vmem:[#allocation2] sm:$0xff]
    %v59 = vpack.c.bf16 %v58, %v58
    %v60 = vld [vmem:[#allocation5] sm:$0xf]
    %v61 = vld [vmem:[#allocation5 + $0x4] sm:$0xf]
    %v62 = vld [vmem:[#allocation5 + $0x8] sm:$0xf]
    %v63 = vld [vmem:[#allocation5 + $0xc] sm:$0xf]
    %v64 = vld [vmem:[%s2] sm:$0x1]
    %v66 = vperm.slane %v64, 0
    %v72 = vunpack.c.l.b16 %v60
    %v73 = vunpack.c.l.b16 %v61
    %v74 = vunpack.c.l.b16 %v62
    %v75 = vunpack.c.l.b16 %v63
    %v76 = vpack.c.b16 %v73, %v72
    %v77 = vpack.c.b16 %v75, %v74
    %vm80 = vcmask 261120
    %v82 = vsel %vm80, %v59, 0
    %84 = vmatpush.bf16.msra.mxu0 0
    %85 = vmatpush.bf16.msra.mxu0 0
    %86 = vmatpush.bf16.msra.mxu0 0
    %87 = vmatpush.bf16.msra.mxu0 0
    %88 = vmatpush.bf16.msra.mxu0 0
    %89 = vmatpush.bf16.msra.mxu0 0
    %90 = vmatpush.bf16.msra.mxu0 %v77
    %91 = vmatpush.bf16.msra.mxu0 %v76
    %92 = vmatmul.bf16.gmra.mxu0 %v82
    %v93 = vpop.f32.mrf.mxu0
    %v94 = vadd.f32 %v66, %v93
    %v95 = vpop.f32.mrf.mxu0
    %96 = vdwg.mxu0
    %v97 = vtanh.pop %v94
    %v98 = vpack.c.bf16 %v97, %v97
    %v99 = vld [vmem:[%s3] sm:$0xf]
    %v100 = vld [vmem:[%s3 + $0x4] sm:$0xf]
    %v101 = vld [vmem:[%s3 + $0x8] sm:$0xf]
    %v102 = vld [vmem:[%s3 + $0xc] sm:$0xf]
    %v103 = vld [vmem:[%s3 + $0x10] sm:$0xf]
    %v104 = vld [vmem:[%s3 + $0x14] sm:$0xf]
    %v105 = vld [vmem:[%s3 + $0x18] sm:$0xf]
    %v106 = vld [vmem:[%s3 + $0x1c] sm:$0xf]
    %v107 = vld [vmem:[%s4] sm:$0x1]
    %v109 = vperm.slane %v107, 0
    %v119 = vunpack.c.l.b16 %v99
    %v120 = vunpack.c.l.b16 %v100
    %v121 = vunpack.c.l.b16 %v101
    %v122 = vunpack.c.l.b16 %v102
    %v123 = vunpack.c.l.b16 %v103
    %v124 = vunpack.c.l.b16 %v104
    %v125 = vunpack.c.l.b16 %v105
    %v126 = vunpack.c.l.b16 %v106
    %v127 = vpack.c.b16 %v120, %v119
    %v128 = vpack.c.b16 %v122, %v121
    %v129 = vpack.c.b16 %v124, %v123
    %v130 = vpack.c.b16 %v126, %v125
    %vm135 = vcmask 523264
    %v137 = vsel %vm135, %v98, 0
    %139 = vmatpush.bf16.msra.mxu0 0
    %140 = vmatpush.bf16.msra.mxu0 0
    %141 = vmatpush.bf16.msra.mxu0 0
    %142 = vmatpush.bf16.msra.mxu0 0
    %143 = vmatpush.bf16.msra.mxu0 %v130
    %144 = vmatpush.bf16.msra.mxu0 %v129
    %145 = vmatpush.bf16.msra.mxu0 %v128
    %146 = vmatpush.bf16.msra.mxu0 %v127
    %147 = vmatmul.bf16.gmra.mxu0 %v137
    %v148 = vpop.f32.mrf.mxu0
    %v149 = vadd.f32 %v109, %v148
    %v150 = vpop.f32.mrf.mxu0
    %151 = vdwg.mxu0
    %v152 = vtanh.pop %v149
    %v153 = vpack.c.bf16 %v152, %v152
    %v154 = vld [vmem:[%s5] sm:$0xf]
    %v155 = vld [vmem:[%s5 + $0x4] sm:$0xf]
    %v156 = vld [vmem:[%s5 + $0x8] sm:$0xf]
    %v157 = vld [vmem:[%s5 + $0xc] sm:$0xf]
    %v158 = vld [vmem:[%s5 + $0x10] sm:$0xf]
    %v159 = vld [vmem:[%s5 + $0x14] sm:$0xf]
    %v160 = vld [vmem:[%s5 + $0x18] sm:$0xf]
    %v161 = vld [vmem:[%s5 + $0x1c] sm:$0xf]
    %v162 = vld [vmem:[%s6] sm:$0x1]
    %v164 = vperm.slane %v162, 0
    %v174 = vunpack.c.l.b16 %v154
    %v175 = vunpack.c.l.b16 %v155
    %v176 = vunpack.c.l.b16 %v156
    %v177 = vunpack.c.l.b16 %v157
    %v178 = vunpack.c.l.b16 %v158
    %v179 = vunpack.c.l.b16 %v159
    %v180 = vunpack.c.l.b16 %v160
    %v181 = vunpack.c.l.b16 %v161
    %v182 = vpack.c.b16 %v175, %v174
    %v183 = vpack.c.b16 %v177, %v176
    %v184 = vpack.c.b16 %v179, %v178
    %v185 = vpack.c.b16 %v181, %v180
    %v191 = vsel %vm135, %v153, 0
    %193 = vmatpush.bf16.msra.mxu0 0
    %194 = vmatpush.bf16.msra.mxu0 0
    %195 = vmatpush.bf16.msra.mxu0 0
    %196 = vmatpush.bf16.msra.mxu0 0
    %197 = vmatpush.bf16.msra.mxu0 %v185
    %198 = vmatpush.bf16.msra.mxu0 %v184
    %199 = vmatpush.bf16.msra.mxu0 %v183
    %200 = vmatpush.bf16.msra.mxu0 %v182
    %201 = vmatmul.bf16.gmra.mxu0 %v191
    %v202 = vpop.f32.mrf.mxu0
    %v203 = vadd.f32 %v164, %v202
    %v204 = vpop.f32.mrf.mxu0
    %205 = vdwg.mxu0
    %vm206 = vcmask 64512
    %207 = vst.msk [vmem:[#allocation7] sm:$0xff] %vm206, %v203
    // Predicated region
    $region38: #{neural_network_forward.1} parent=1 // pred_check
      _
    $region39: #{neural_network_forward.1} parent=1 // pred_check_branch
      %209 = sbr.rel (0) target = $region41
    $region40: #{neural_network_forward.1} parent=1 // pred_region
      %211 = vsyncadd [#allocation4], 0
      %s213 = sshll.u32 [#allocation7], 4
      %s214 = int_to_ptr.vmem [resolvable:$true] %s213
      %s215 = sshll.u32 %s7, 4
      %s216 = int_to_ptr.hbm [resolvable:$true] %s215
      %218 = dma.vmem_to_hbm [thread:$0]  %s214, 128, %s216, [#allocation4]
    $region41: #{neural_network_forward.1} parent=1 // pred_fallthru
      _
    // Predicated region
    $region42: #{neural_network_forward.1} parent=1 // pred_check
      _
    $region43: #{neural_network_forward.1} parent=1 // pred_check_branch
      %220 = sbr.rel (0) target = $region45
    $region44: #{neural_network_forward.1} parent=1 // pred_region
      %222 = dma.done [#allocation4], 128
    $region45: #{neural_network_forward.1} parent=1 // pred_fallthru
      _
    %223 = vsyncpa [#allocation3], 1
    %224 = vsyncpa [#allocation6], 1
    %225 = vsyncpa [#allocation4], 1

</llo_original>
